<compile_context>
chip_gen: v7x
topology: tpu7x:2x2x1
jax: 0.10.0
libtpu: 0.0.40
codegen_flags: <defaults>
</compile_context>

<pallas_src>
import functools

import jax
import jax.numpy as jnp
from jax import lax
from jax.experimental import pallas as pl
from jax.experimental.pallas import tpu as pltpu


HALO = 128  # input-halo width in frames; must be >= num_taps - 1 and lane aligned


# ----------------------------------------------------------------------------
# Pallas kernel: one (batch, time-tile) per grid step.  Both axes parallel.
# ----------------------------------------------------------------------------
def _conv_transpose_kernel(x_ref, xh_ref, w_ref, b_ref, o_ref, *,
                           stride, num_taps, t_total, t_tile, chunk):
    # x_ref  : (1, C, T_TILE)       f32   main activation tile (NCL layout)
    # xh_ref : (1, C, HALO)         f32   left halo: the 128 frames before tile
    # w_ref  : (K, C)               bf16  transposed weight
    # b_ref  : (1, 1)               f32   SMEM scalar bias
    # o_ref  : (1, stride, T_TILE)  f32   lane-dense output tile
    tt = pl.program_id(1)
    w = w_ref[...]                                   # (K, C) bf16
    bias = b_ref[0, 0]
    tile_start = tt * t_tile

    n_chunks = t_tile // chunk
    col_c = lax.broadcasted_iota(jnp.int32, (1, chunk), 1)   # lane idx in chunk
    col_h = lax.broadcasted_iota(jnp.int32, (1, HALO), 1)    # lane idx in halo
    zero_spill = jnp.zeros((stride, HALO), jnp.float32)
    if chunk > HALO:
        zero_tail = jnp.zeros((stride, chunk - HALO), jnp.float32)

    # ---- halo: recompute the previous 128 frames' spill (replaces the carry)
    spill = zero_spill
    if num_taps > 1:
        gfr_h = tile_start - HALO + col_h            # global frame index (1, HALO)
        xh = xh_ref[0]                               # (C, HALO) f32
        xh = jnp.where((gfr_h >= 0) & (gfr_h < t_total), xh, 0.0).astype(w.dtype)
        yh = jnp.dot(w, xh, preferred_element_type=jnp.float32)   # (K, HALO)
        for j in range(1, num_taps):
            rolled = pltpu.roll(yh[j * stride:(j + 1) * stride, :], shift=j, axis=1)
            # circular-roll wrap (lanes < j) = contributions to this tile's
            # first output frames; the rest belongs to the previous tile.
            spill = spill + jnp.where(col_h < j, rolled, 0.0)

    # ---- main tile, chunked over the lane axis (vreg-safe) -------------------
    for c in range(n_chunks):
        c0 = c * chunk
        gfr = tile_start + c0 + col_c                # global frame index (1, chunk)
        xc = x_ref[0, :, c0:c0 + chunk]              # (C, chunk) f32
        xc = jnp.where(gfr < t_total, xc, 0.0).astype(w.dtype)   # mask + cast
        yc = jnp.dot(w, xc, preferred_element_type=jnp.float32)  # (K, chunk) MXU

        if chunk > HALO:
            acc = jnp.concatenate([spill, zero_tail], axis=1)    # (stride, chunk)
        else:
            acc = spill
        acc = acc + yc[0:stride, :]                  # tap j = 0 (no shift)

        new_spill = zero_spill
        for j in range(1, num_taps):
            rolled = pltpu.roll(yc[j * stride:(j + 1) * stride, :], shift=j, axis=1)
            acc = acc + jnp.where(col_c >= j, rolled, 0.0)
            new_spill = new_spill + jnp.where(col_h < j, rolled[:, :HALO], 0.0)
        spill = new_spill

        # lane-dense unmasked store (chunk is a multiple of 128), bias folded in.
        o_ref[0, :, c0:c0 + chunk] = acc + bias
    # The trailing spill (output frames >= tile end) is intentionally dropped:
    # the next time tile recomputes it from its own 128-frame input halo.


# ----------------------------------------------------------------------------
# Wrapper: one ConvTranspose1d(C -> 1, kernel_size=K, stride=s)
# ----------------------------------------------------------------------------
def conv_transpose_1d(x, w, b, *, kernel_size, stride, t_tile=2048):
    """x: (B, C, T) f32 -> (B, 1, (T-1)*stride + kernel_size) f32."""
    B, C, T = x.shape
    K = kernel_size
    assert w.shape == (C, K)
    assert K % stride == 0, "kernel_size must be a multiple of stride"
    num_taps = K // stride
    assert 1 <= num_taps - 1 < HALO, "halo window must cover num_taps - 1 frames"
    P = T + num_taps - 1                  # output frames
    L = (T - 1) * stride + K
    assert L == P * stride

    assert t_tile % 128 == 0 and t_tile >= 128
    T_TILE = max(128, min(t_tile, pl.cdiv(P, 128) * 128))
    n_t = pl.cdiv(P, T_TILE)

    # Overlap-add chunk: largest multiple of 128 (<= 512) dividing T_TILE.
    CH = 128
    for cand in (512, 384, 256, 128):
        if T_TILE % cand == 0:
            CH = cand
            break

    wT = jnp.transpose(w, (1, 0)).astype(jnp.bfloat16)   # (K, C), tiny
    b2 = jnp.asarray(b, jnp.float32).reshape(1, 1)

    # Index-map clamps keep every DMA source in-bounds; out-of-range frames are
    # zero-masked inside the kernel using the true (un-clamped) tile index.
    n_main_blocks = pl.cdiv(T, T_TILE)
    n_halo_blocks = pl.cdiv(T, HALO)
    halo_per_tile = T_TILE // HALO

    def x_main_map(bb, tt):
        return (bb, 0, jnp.minimum(tt, n_main_blocks - 1))

    def x_halo_map(bb, tt):
        idx = tt * halo_per_tile - 1
        idx = jnp.minimum(jnp.maximum(idx, 0), n_halo_blocks - 1)
        return (bb, 0, idx)

    x_blk_bytes = C * T_TILE * 4
    vmem_limit = int(min(112 * 2**20, max(32 * 2**20, 3 * x_blk_bytes + 8 * 2**20)))

    cost = pl.CostEstimate(
        flops=2 * B * C * K * n_t * (T_TILE + HALO),
        transcendentals=0,
        bytes_accessed=(B * C * (T + n_t * HALO) * 4   # x (main + halo re-read)
                        + K * C * 2                     # weight
                        + B * stride * P * 4),          # output
    )

    out = pl.pallas_call(
        functools.partial(_conv_transpose_kernel, stride=stride,
                          num_taps=num_taps, t_total=T, t_tile=T_TILE, chunk=CH),
        out_shape=jax.ShapeDtypeStruct((B, stride, P), jnp.float32),
        grid=(B, n_t),
        in_specs=[
            pl.BlockSpec((1, C, T_TILE), x_main_map),
            pl.BlockSpec((1, C, HALO), x_halo_map),
            pl.BlockSpec((K, C), lambda bb, tt: (0, 0)),
            pl.BlockSpec(memory_space=pltpu.MemorySpace.SMEM),
        ],
        out_specs=pl.BlockSpec((1, stride, T_TILE), lambda bb, tt: (bb, 0, tt)),
        compiler_params=pltpu.CompilerParams(
            dimension_semantics=("parallel", "parallel"),
            vmem_limit_bytes=vmem_limit),
        cost_estimate=cost,
    )(x, x, wT, b2)

    # Layout plumbing only (kernel store stays lane-dense).  Could be folded
    # into the consumer if it accepts (B, stride, P) directly.
    out = jnp.transpose(out, (0, 2, 1))                 # (B, P, stride)
    return out.reshape(B, 1, L)


# ----------------------------------------------------------------------------
# Decoder module (forward pass only)
# ----------------------------------------------------------------------------
SHORT_K, MIDDLE_K, LONG_K = 20, 80, 160
ENC_CH = 256
STRIDE = SHORT_K // 2   # 10


def init_decoder_params(key):
    ks = jax.random.split(key, 6)

    def w(k, K):
        # deterministic synthetic init (PyTorch weight shape (C, 1, K) -> (C, K))
        return 0.02 * jax.random.normal(k, (ENC_CH, K), jnp.float32)

    def bias(k):
        return 0.02 * jax.random.normal(k, (), jnp.float32)

    return {
        "short":  {"w": w(ks[0], SHORT_K),  "b": bias(ks[1])},
        "middle": {"w": w(ks[2], MIDDLE_K), "b": bias(ks[3])},
        "long":   {"w": w(ks[4], LONG_K),   "b": bias(ks[5])},
    }


def decoder_forward(params, short, middle, long, *, t_tile=2048):
    # TODO(synk): fuse the three layers into one pallas_call only if the
    # upstream producer can emit the inputs already stacked as (3, B, C, T);
    # a wrapper-side stack/concatenate would add a full extra HBM copy.
    s = conv_transpose_1d(short, params["short"]["w"], params["short"]["b"],
                          kernel_size=SHORT_K, stride=STRIDE, t_tile=t_tile)
    m = conv_transpose_1d(middle, params["middle"]["w"], params["middle"]["b"],
                          kernel_size=MIDDLE_K, stride=STRIDE, t_tile=t_tile)
    l = conv_transpose_1d(long, params["long"]["w"], params["long"]["b"],
                          kernel_size=LONG_K, stride=STRIDE, t_tile=t_tile)
    return s, m, l


# ----------------------------------------------------------------------------
# Pure-JAX reference (ConvTranspose1d semantics, inputs rounded to bf16 to
# match the kernel's matmul precision; accumulation in f32).
# ----------------------------------------------------------------------------
def _ref_conv_transpose_1d(x, w, b, kernel_size, stride):
    B, C, T = x.shape
    K = kernel_size
    num_taps = K // stride
    P = T + num_taps - 1
    L = (T - 1) * stride + K
    xr = x.astype(jnp.bfloat16).astype(jnp.float32)
    wr = w.astype(jnp.bfloat16).astype(jnp.float32)
    y = jnp.einsum("bct,ck->btk", xr, wr)                 # (B, T, K)
    out3 = jnp.zeros((B, P, stride), jnp.float32)
    for j in range(num_taps):
        out3 = out3.at[:, j:j + T, :].add(y[:, :, j * stride:(j + 1) * stride])
    return out3.reshape(B, 1, L) + jnp.float32(b)


if __name__ == "__main__":
    key = jax.random.PRNGKey(0)
    kp, k1, k2, k3, k4, k5, k6 = jax.random.split(key, 7)
    params = init_decoder_params(kp)

    ATOL = RTOL = 2e-3

    # --- test 1: small shapes, all three layers --------------------------------
    B, T = 2, 8
    short = jax.random.normal(k1, (B, ENC_CH, T), jnp.float32)
    middle = jax.random.normal(k2, (B, ENC_CH, T), jnp.float32)
    long = jax.random.normal(k3, (B, ENC_CH, T), jnp.float32)

    s, m, l = decoder_forward(params, short, middle, long)
    jax.block_until_ready((s, m, l))

    s_ref = _ref_conv_transpose_1d(short, params["short"]["w"],
                                   params["short"]["b"], SHORT_K, STRIDE)
    m_ref = _ref_conv_transpose_1d(middle, params["middle"]["w"],
                                   params["middle"]["b"], MIDDLE_K, STRIDE)
    l_ref = _ref_conv_transpose_1d(long, params["long"]["w"],
                                   params["long"]["b"], LONG_K, STRIDE)

    assert s.shape == (B, 1, (T - 1) * STRIDE + SHORT_K)
    assert m.shape == (B, 1, (T - 1) * STRIDE + MIDDLE_K)
    assert l.shape == (B, 1, (T - 1) * STRIDE + LONG_K)
    assert jnp.allclose(s, s_ref, atol=ATOL, rtol=RTOL)
    assert jnp.allclose(m, m_ref, atol=ATOL, rtol=RTOL)
    assert jnp.allclose(l, l_ref, atol=ATOL, rtol=RTOL)

    # --- test 2: multi-tile time axis (exercises the halo re-read) -------------
    T2 = 260
    x2 = jax.random.normal(k4, (1, ENC_CH, T2), jnp.float32)
    l2 = conv_transpose_1d(x2, params["long"]["w"], params["long"]["b"],
                           kernel_size=LONG_K, stride=STRIDE, t_tile=128)
    jax.block_until_ready(l2)
    l2_ref = _ref_conv_transpose_1d(x2, params["long"]["w"],
                                    params["long"]["b"], LONG_K, STRIDE)
    assert l2.shape == (1, 1, (T2 - 1) * STRIDE + LONG_K)
    assert jnp.allclose(l2, l2_ref, atol=ATOL, rtol=RTOL)

    # --- test 3: last tile's main block fully past T (clamp + mask path) -------
    T3 = 128
    x3 = jax.random.normal(k5, (1, ENC_CH, T3), jnp.float32)
    l3 = conv_transpose_1d(x3, params["long"]["w"], params["long"]["b"],
                           kernel_size=LONG_K, stride=STRIDE, t_tile=128)
    jax.block_until_ready(l3)
    l3_ref = _ref_conv_transpose_1d(x3, params["long"]["w"],
                                    params["long"]["b"], LONG_K, STRIDE)
    assert l3.shape == (1, 1, (T3 - 1) * STRIDE + LONG_K)
    assert jnp.allclose(l3, l3_ref, atol=ATOL, rtol=RTOL)

    # --- test 4: multiple chunks per tile (intra-tile spill propagation) -------
    T4 = 600
    x4 = jax.random.normal(k6, (1, ENC_CH, T4), jnp.float32)
    m4 = conv_transpose_1d(x4, params["middle"]["w"], params["middle"]["b"],
                           kernel_size=MIDDLE_K, stride=STRIDE, t_tile=256)
    jax.block_until_ready(m4)
    m4_ref = _ref_conv_transpose_1d(x4, params["middle"]["w"],
                                    params["middle"]["b"], MIDDLE_K, STRIDE)
    assert m4.shape == (1, 1, (T4 - 1) * STRIDE + MIDDLE_K)
    assert jnp.allclose(m4, m4_ref, atol=ATOL, rtol=RTOL)

    print("KERNEL_OK")
</pallas_src>

<mosaic_0001>
module attributes {stable_mosaic.version = 11 : i64} {
  func.func @_conv_transpose_kernel(%arg0: i32, %arg1: i32, %arg2: memref<1x256x128xf32, #tpu.memory_space<vmem>>, %arg3: memref<1x256x128xf32, #tpu.memory_space<vmem>>, %arg4: memref<20x256xbf16, #tpu.memory_space<vmem>>, %arg5: memref<1x1xf32, #tpu.memory_space<smem>>, %arg6: memref<1x10x128xf32, #tpu.memory_space<vmem>>) attributes {dimension_semantics = [#tpu.dimension_semantics<parallel>, #tpu.dimension_semantics<parallel>], iteration_bounds = array<i64: 2, 1>, scalar_prefetch = 0 : i64, scratch_operands = 0 : i64, tpu.core_type = #tpu.core_type<tc>, window_params = [{transform_indices = @transform_0, window_bounds = array<i64: 1, 256, 128>}, {transform_indices = @transform_1, window_bounds = array<i64: 1, 256, 128>}, {pipeline_mode = #tpu.pipeline_mode<synchronous>, transform_indices = @transform_2, window_bounds = array<i64: 20, 256>}, {transform_indices = @transform_3, window_bounds = array<i64: 1, 1>}, {transform_indices = @transform_4, window_bounds = array<i64: 1, 10, 128>}]} {
    %c0 = arith.constant 0 : index
    %c0_0 = arith.constant 0 : index
    %0 = vector.load %arg4[%c0, %c0_0] : memref<20x256xbf16, #tpu.memory_space<vmem>>, vector<20x256xbf16>
    %c0_1 = arith.constant 0 : index
    %c0_2 = arith.constant 0 : index
    %1 = memref.load %arg5[%c0_1, %c0_2] : memref<1x1xf32, #tpu.memory_space<smem>>
    %c128_i32 = arith.constant 128 : i32
    %2 = arith.muli %arg1, %c128_i32 : i32
    %3 = tpu.iota {dimensions = array<i32: 1>} : vector<1x128xi32>
    %4 = tpu.iota {dimensions = array<i32: 1>} : vector<1x128xi32>
    %cst = arith.constant 0.000000e+00 : f32
    %5 = vector.broadcast %cst : f32 to vector<10x128xf32>
    %c128_i32_3 = arith.constant 128 : i32
    %6 = arith.subi %2, %c128_i32_3 : i32
    %7 = vector.broadcast %6 : i32 to vector<1x128xi32>
    %8 = arith.addi %7, %4 : vector<1x128xi32>
    %c0_4 = arith.constant 0 : index
    %c0_5 = arith.constant 0 : index
    %c0_6 = arith.constant 0 : index
    %9 = vector.load %arg3[%c0_4, %c0_5, %c0_6] : memref<1x256x128xf32, #tpu.memory_space<vmem>>, vector<1x256x128xf32>
    %10 = vector.shape_cast %9 : vector<1x256x128xf32> to vector<256x128xf32>
    %c0_i32 = arith.constant 0 : i32
    %11 = vector.broadcast %c0_i32 : i32 to vector<1x128xi32>
    %12 = arith.cmpi sge, %8, %11 : vector<1x128xi32>
    %c8_i32 = arith.constant 8 : i32
    %13 = vector.broadcast %c8_i32 : i32 to vector<1x128xi32>
    %14 = arith.cmpi slt, %8, %13 : vector<1x128xi32>
    %15 = arith.andi %12, %14 : vector<1x128xi1>
    %cst_7 = arith.constant 0.000000e+00 : f32
    %16 = vector.shape_cast %15 : vector<1x128xi1> to vector<1x128xi1>
    %17 = vector.broadcast %16 : vector<1x128xi1> to vector<256x128xi1>
    %18 = vector.broadcast %cst_7 : f32 to vector<256x128xf32>
    %19 = arith.select %17, %10, %18 : vector<256x128xi1>, vector<256x128xf32>
    %20 = arith.truncf %19 : vector<256x128xf32> to vector<256x128xbf16>
    %cst_8 = arith.constant dense<0.000000e+00> : vector<20x128xf32>
    %21 = tpu.matmul %0, %20, %cst_8 {dimension_numbers = #tpu.dot_dimension_numbers<[1], [0], [0], [1], [0, 0, 1, 1], [], []>} : vector<20x256xbf16>, vector<256x128xbf16>, vector<20x128xf32> -> vector<20x128xf32>
    %22 = vector.extract_strided_slice %21 {offsets = [10, 0], sizes = [10, 128], strides = [1, 1]} : vector<20x128xf32> to vector<10x128xf32>
    %c1_i32 = arith.constant 1 : i32
    %23 = tpu.dynamic_rotate %22 by %c1_i32 dim 1 : vector<10x128xf32>, i32 -> vector<10x128xf32>
    %c1_i32_9 = arith.constant 1 : i32
    %24 = vector.broadcast %c1_i32_9 : i32 to vector<1x128xi32>
    %25 = arith.cmpi slt, %4, %24 : vector<1x128xi32>
    %cst_10 = arith.constant 0.000000e+00 : f32
    %26 = vector.shape_cast %25 : vector<1x128xi1> to vector<1x128xi1>
    %27 = vector.broadcast %26 : vector<1x128xi1> to vector<10x128xi1>
    %28 = vector.broadcast %cst_10 : f32 to vector<10x128xf32>
    %29 = arith.select %27, %23, %28 : vector<10x128xi1>, vector<10x128xf32>
    %30 = arith.addf %5, %29 : vector<10x128xf32>
    %c0_i32_11 = arith.constant 0 : i32
    %31 = arith.addi %2, %c0_i32_11 : i32
    %32 = vector.broadcast %31 : i32 to vector<1x128xi32>
    %33 = arith.addi %32, %3 : vector<1x128xi32>
    %c0_12 = arith.constant 0 : index
    %c0_13 = arith.constant 0 : index
    %c0_14 = arith.constant 0 : index
    %34 = vector.load %arg2[%c0_12, %c0_13, %c0_14] : memref<1x256x128xf32, #tpu.memory_space<vmem>>, vector<1x256x128xf32>
    %35 = vector.shape_cast %34 : vector<1x256x128xf32> to vector<256x128xf32>
    %c8_i32_15 = arith.constant 8 : i32
    %36 = vector.broadcast %c8_i32_15 : i32 to vector<1x128xi32>
    %37 = arith.cmpi slt, %33, %36 : vector<1x128xi32>
    %cst_16 = arith.constant 0.000000e+00 : f32
    %38 = vector.shape_cast %37 : vector<1x128xi1> to vector<1x128xi1>
    %39 = vector.broadcast %38 : vector<1x128xi1> to vector<256x128xi1>
    %40 = vector.broadcast %cst_16 : f32 to vector<256x128xf32>
    %41 = arith.select %39, %35, %40 : vector<256x128xi1>, vector<256x128xf32>
    %42 = arith.truncf %41 : vector<256x128xf32> to vector<256x128xbf16>
    %cst_17 = arith.constant dense<0.000000e+00> : vector<20x128xf32>
    %43 = tpu.matmul %0, %42, %cst_17 {dimension_numbers = #tpu.dot_dimension_numbers<[1], [0], [0], [1], [0, 0, 1, 1], [], []>} : vector<20x256xbf16>, vector<256x128xbf16>, vector<20x128xf32> -> vector<20x128xf32>
    %44 = vector.extract_strided_slice %43 {offsets = [0, 0], sizes = [10, 128], strides = [1, 1]} : vector<20x128xf32> to vector<10x128xf32>
    %45 = arith.addf %30, %44 : vector<10x128xf32>
    %46 = vector.extract_strided_slice %43 {offsets = [10, 0], sizes = [10, 128], strides = [1, 1]} : vector<20x128xf32> to vector<10x128xf32>
    %c1_i32_18 = arith.constant 1 : i32
    %47 = tpu.dynamic_rotate %46 by %c1_i32_18 dim 1 : vector<10x128xf32>, i32 -> vector<10x128xf32>
    %c1_i32_19 = arith.constant 1 : i32
    %48 = vector.broadcast %c1_i32_19 : i32 to vector<1x128xi32>
    %49 = arith.cmpi sge, %3, %48 : vector<1x128xi32>
    %cst_20 = arith.constant 0.000000e+00 : f32
    %50 = vector.shape_cast %49 : vector<1x128xi1> to vector<1x128xi1>
    %51 = vector.broadcast %50 : vector<1x128xi1> to vector<10x128xi1>
    %52 = vector.broadcast %cst_20 : f32 to vector<10x128xf32>
    %53 = arith.select %51, %47, %52 : vector<10x128xi1>, vector<10x128xf32>
    %54 = arith.addf %45, %53 : vector<10x128xf32>
    %55 = vector.broadcast %1 : f32 to vector<10x128xf32>
    %56 = arith.addf %54, %55 : vector<10x128xf32>
    %c0_21 = arith.constant 0 : index
    %c0_22 = arith.constant 0 : index
    %c0_23 = arith.constant 0 : index
    %57 = vector.load %arg6[%c0_21, %c0_22, %c0_23] : memref<1x10x128xf32, #tpu.memory_space<vmem>>, vector<1x10x128xf32>
    %58 = vector.shape_cast %57 : vector<1x10x128xf32> to vector<10x128xf32>
    %59 = vector.shape_cast %56 : vector<10x128xf32> to vector<1x10x128xf32>
    tpu.vector_store %arg6[%c0_21, %c0_22, %c0_23], %59 {strides = array<i32>} : memref<1x10x128xf32, #tpu.memory_space<vmem>>, vector<1x10x128xf32>,
    return
  }
  func.func @transform_0(%arg0: i32, %arg1: i32) -> (i32, i32, i32) {
    %c0_i32 = arith.constant 0 : i32
    %0 = arith.minsi %arg1, %c0_i32 : i32
    %c0_i32_0 = arith.constant 0 : i32
    %c0_i32_1 = arith.constant 0 : i32
    return %arg0, %c0_i32_0, %0 : i32, i32, i32
  }
  func.func @transform_1(%arg0: i32, %arg1: i32) -> (i32, i32, i32) {
    %c1_i32 = arith.constant 1 : i32
    %0 = arith.muli %arg1, %c1_i32 : i32
    %c1_i32_0 = arith.constant 1 : i32
    %1 = arith.subi %0, %c1_i32_0 : i32
    %c0_i32 = arith.constant 0 : i32
    %2 = arith.maxsi %1, %c0_i32 : i32
    %c0_i32_1 = arith.constant 0 : i32
    %3 = arith.minsi %2, %c0_i32_1 : i32
    %c0_i32_2 = arith.constant 0 : i32
    %c0_i32_3 = arith.constant 0 : i32
    return %arg0, %c0_i32_2, %3 : i32, i32, i32
  }
  func.func @transform_2(%arg0: i32, %arg1: i32) -> (i32, i32) {
    %c0_i32 = arith.constant 0 : i32
    %c0_i32_0 = arith.constant 0 : i32
    %c0_i32_1 = arith.constant 0 : i32
    return %c0_i32, %c0_i32_0 : i32, i32
  }
  func.func @transform_3(%arg0: i32, %arg1: i32) -> (i32, i32) {
    %c0_i32 = arith.constant 0 : i32
    %c0_i32_0 = arith.constant 0 : i32
    %c0_i32_1 = arith.constant 0 : i32
    return %c0_i32, %c0_i32_0 : i32, i32
  }
  func.func @transform_4(%arg0: i32, %arg1: i32) -> (i32, i32, i32) {
    %c0_i32 = arith.constant 0 : i32
    %c0_i32_0 = arith.constant 0 : i32
    return %arg0, %c0_i32, %arg1 : i32, i32, i32
  }
}

</mosaic_0001>

<llo_original>
// kernel: tpu_custom_call.1
$region0: #{tpu_custom_call.1}
  #allocation0 [shape = 'u32[]', space=smem, size = 0x4, offset = 0x4, fixed_abs, tag = 'smem constant byte address 0x4 - core index']
  #allocation1 [shape = 'u32[144,128]{1,0:T(1,128)}', space=vmem, size = 0x12000, scoped, tag = 'internal scratch']
  #allocation2 [shape = 'f32[1,1]{1,0:T(1,128)S(6)}', space=smem, size = 0x200, scoped, tag = 'scoped memory for tpu_custom_call.1']
  %s0 = inlined_call_operand.vmem [shape: f32[2,256,8], index: 0, kind: input, shape index: {}]
  %s1 = inlined_call_operand.vmem [shape: f32[2,256,8], index: 1, kind: input, shape index: {}]
  %s2 = inlined_call_operand.vmem [shape: bf16[20,256], index: 2, kind: input, shape index: {}]
  %s3 = inlined_call_operand.<no memory space> [shape: f32[1,1], index: 3, kind: input, shape index: {}]
  %s4 = inlined_call_operand.vmem [shape: f32[2,10,9], index: 4, kind: output, shape index: {}]
  %s5 = sld [smem:[#allocation0]]
  $region49: #{tpu_custom_call.1} parent=0
    _
  %s7 = ssub.s32 1, %s5
  %s8 = scalar_select 0, %s7, %s5
  %9 = sst [smem:[#allocation2]] %s3
  loop: start=0, step=1, limit=4
  $region2: #{tpu_custom_call.1} parent=0 // loop_pre_header
    _
  $region3: #{tpu_custom_call.1} parent=0 // loop_header
    %s11 = sphi 0, %s15
    %p12 = scmp.ge.s32.totalorder %s11, 4
    %s18 = sphi 0, %s30
    %s19 = sphi 0, %s26
    %s20 = sphi 0, %s18
    %s21 = sphi 0, %s19
    %s22 = sphi 0, %s20
    %s23 = sphi 0, %s21
    %s39 = sphi 0, %s41
    %s42 = sphi 0, %s39
    %s43 = sphi 0, %s42
    %s59 = sphi 0, %s43
    %s77 = sphi 0, %s79
    %s80 = sphi 0, %s77
    %s81 = sphi 0, %s80
    %s97 = sphi 0, %s81
    %s101 = sphi 0, %s101
    %s103 = sphi 0, %s101
    %s104 = sphi 0, %s103
    %s118 = sphi 0, %s104
    %s122 = sphi 0, %s122
    %s124 = sphi 0, %s122
    %s125 = sphi 0, %s124
    %s139 = sphi 0, %s125
    %s147 = sphi 0, %s149
    %s150 = sphi 0, %s147
    %s151 = sphi 0, %s150
    %s167 = sphi 0, %s151
  $region4: #{tpu_custom_call.1} parent=0 // loop_header_branch
    %14 = sbr.rel (%p12) target = $region8
  $region5: #{tpu_custom_call.1} parent=0 // loop_body
    %s16 = ssub.s32 %s11, 1
    %s17 = ssub.s32 %s11, 2
    %s24 = sadd.s32 1, %s19
    %p25 = scmp.ge.s32.totalorder %s24, 1
    %s26 = scalar_select %p25, 0, %s24
    %s27 = sadd.s32 1, %s18
    %s28 = scalar_select %p25, %s27, %s18
    %p29 = scmp.ge.s32.totalorder %s28, 2
    %s30 = scalar_select %p29, 0, %s28
    %p31 = scmp.lt.s32.totalorder %s19, 0
    %s32 = scalar_select %p31, %s19, 0
    %p33 = scmp.lt.s32.totalorder %s26, 0
    %s34 = scalar_select %p33, %s26, 0
    %s35 = ssub.s32 %s18, %s30
    %s36 = ssub.s32 %s32, %s34
    %s37 = sor.u32 %s35, %s36
    %p38 = scmp.eq.s32.totalorder %s37, 0
    %s40 = sadd.s32 %s39, 1
    %s41 = scalar_select %p38, %s39, %s40
    %p44 = pneg %p38
    %p45 = scmp.eq.s32.totalorder %s11, 1
    %p46 = por %p44, %p45
    %p47 = scmp.ne.s32.totalorder %s39, %s42
    %p48 = scmp.eq.s32.totalorder %s11, 0
    %p49 = por %p47, %p48
    %p50 = scmp.ne.s32.totalorder %s39, %s42
    %p51 = scmp.eq.s32.totalorder %s16, 1
    %p52 = por %p50, %p51
    %p53 = scmp.ne.s32.totalorder %s42, %s43
    %p54 = scmp.eq.s32.totalorder %s16, 0
    %p55 = por %p53, %p54
    %p56 = scmp.ne.s32.totalorder %s42, %s43
    %p57 = scmp.eq.s32.totalorder %s17, 1
    %p58 = por %p56, %p57
    %p60 = scmp.ne.s32.totalorder %s43, %s59
    %p61 = scmp.eq.s32.totalorder %s17, 0
    %p62 = por %p60, %p61
    %s63 = ssub.s32 %s19, 1
    %p64 = scmp.gt.s32.totalorder %s63, 0
    %s65 = scalar_select %p64, %s63, 0
    %p66 = scmp.lt.s32.totalorder %s65, 0
    %s67 = scalar_select %p66, %s65, 0
    %s68 = ssub.s32 %s26, 1
    %p69 = scmp.gt.s32.totalorder %s68, 0
    %s70 = scalar_select %p69, %s68, 0
    %p71 = scmp.lt.s32.totalorder %s70, 0
    %s72 = scalar_select %p71, %s70, 0
    %s73 = ssub.s32 %s18, %s30
    %s74 = ssub.s32 %s67, %s72
    %s75 = sor.u32 %s73, %s74
    %p76 = scmp.eq.s32.totalorder %s75, 0
    %s78 = sadd.s32 %s77, 1
    %s79 = scalar_select %p76, %s77, %s78
    %p82 = pneg %p76
    %p83 = scmp.eq.s32.totalorder %s11, 1
    %p84 = por %p82, %p83
    %p85 = scmp.ne.s32.totalorder %s77, %s80
    %p86 = scmp.eq.s32.totalorder %s11, 0
    %p87 = por %p85, %p86
    %p88 = scmp.ne.s32.totalorder %s77, %s80
    %p89 = scmp.eq.s32.totalorder %s16, 1
    %p90 = por %p88, %p89
    %p91 = scmp.ne.s32.totalorder %s80, %s81
    %p92 = scmp.eq.s32.totalorder %s16, 0
    %p93 = por %p91, %p92
    %p94 = scmp.ne.s32.totalorder %s80, %s81
    %p95 = scmp.eq.s32.totalorder %s17, 1
    %p96 = por %p94, %p95
    %p98 = scmp.ne.s32.totalorder %s81, %s97
    %p99 = scmp.eq.s32.totalorder %s17, 0
    %p100 = por %p98, %p99
    %s102 = sadd.s32 %s101, 1
    %p105 = scmp.eq.s32.totalorder %s11, 1
    %p106 = scmp.ne.s32.totalorder %s101, %s103
    %p107 = scmp.eq.s32.totalorder %s11, 0
    %p108 = por %p106, %p107
    %p109 = scmp.ne.s32.totalorder %s101, %s103
    %p110 = scmp.eq.s32.totalorder %s16, 1
    %p111 = por %p109, %p110
    %p112 = scmp.ne.s32.totalorder %s103, %s104
    %p113 = scmp.eq.s32.totalorder %s16, 0
    %p114 = por %p112, %p113
    %p115 = scmp.ne.s32.totalorder %s103, %s104
    %p116 = scmp.eq.s32.totalorder %s17, 1
    %p117 = por %p115, %p116
    %p119 = scmp.ne.s32.totalorder %s104, %s118
    %p120 = scmp.eq.s32.totalorder %s17, 0
    %p121 = por %p119, %p120
    %s123 = sadd.s32 %s122, 1
    %p126 = scmp.eq.s32.totalorder %s11, 1
    %p127 = scmp.ne.s32.totalorder %s122, %s124
    %p128 = scmp.eq.s32.totalorder %s11, 0
    %p129 = por %p127, %p128
    %p130 = scmp.ne.s32.totalorder %s122, %s124
    %p131 = scmp.eq.s32.totalorder %s16, 1
    %p132 = por %p130, %p131
    %p133 = scmp.ne.s32.totalorder %s124, %s125
    %p134 = scmp.eq.s32.totalorder %s16, 0
    %p135 = por %p133, %p134
    %p136 = scmp.ne.s32.totalorder %s124, %s125
    %p137 = scmp.eq.s32.totalorder %s17, 1
    %p138 = por %p136, %p137
    %p140 = scmp.ne.s32.totalorder %s125, %s139
    %p141 = scmp.eq.s32.totalorder %s17, 0
    %p142 = por %p140, %p141
    %s143 = ssub.s32 %s18, %s30
    %s144 = ssub.s32 %s19, %s26
    %s145 = sor.u32 %s143, %s144
    %p146 = scmp.eq.s32.totalorder %s145, 0
    %s148 = sadd.s32 %s147, 1
    %s149 = scalar_select %p146, %s147, %s148
    %p152 = pneg %p146
    %p153 = scmp.eq.s32.totalorder %s11, 1
    %p154 = por %p152, %p153
    %p155 = scmp.ne.s32.totalorder %s147, %s150
    %p156 = scmp.eq.s32.totalorder %s11, 0
    %p157 = por %p155, %p156
    %p158 = scmp.ne.s32.totalorder %s147, %s150
    %p159 = scmp.eq.s32.totalorder %s16, 1
    %p160 = por %p158, %p159
    %p161 = scmp.ne.s32.totalorder %s150, %s151
    %p162 = scmp.eq.s32.totalorder %s16, 0
    %p163 = por %p161, %p162
    %p164 = scmp.ne.s32.totalorder %s150, %s151
    %p165 = scmp.eq.s32.totalorder %s17, 1
    %p166 = por %p164, %p165
    %p168 = scmp.ne.s32.totalorder %s151, %s167
    %p169 = scmp.eq.s32.totalorder %s17, 0
    %p170 = por %p168, %p169
    %p171 = scmp.le.s32.totalorder 1, %s11
    %p172 = scmp.lt.s32.totalorder %s11, 3
    %p173 = pnand %p171, %p172
    %p174 = pneg %p173
    // Predicated region
    $region9: #{tpu_custom_call.1} parent=5 // pred_check
      _
    $region10: #{tpu_custom_call.1} parent=5 // pred_check_branch
      %176 = sbr.rel (%p173) target = $region12
    $region11: #{tpu_custom_call.1} parent=5 // pred_region
      %s177 = ssub.s32 %s11, 1
      // Predicated region
      $region13: #{tpu_custom_call.1} parent=11 // pred_check
        %p178 = pneg %p114
      $region14: #{tpu_custom_call.1} parent=11 // pred_check_branch
        %180 = sbr.rel (%p178) target = $region16
      $region15: #{tpu_custom_call.1} parent=11 // pred_region
        _
      $region16: #{tpu_custom_call.1} parent=11 // pred_fallthru
        _
      // Predicated region
      $region17: #{tpu_custom_call.1} parent=11 // pred_check
        %p181 = pneg %p135
      $region18: #{tpu_custom_call.1} parent=11 // pred_check_branch
        %183 = sbr.rel (%p181) target = $region20
      $region19: #{tpu_custom_call.1} parent=11 // pred_region
        _
      $region20: #{tpu_custom_call.1} parent=11 // pred_fallthru
        _
    $region12: #{tpu_custom_call.1} parent=5 // pred_fallthru
      _
    %p184 = scmp.lt.s32.totalorder %s11, 2
    // Predicated region
    $region21: #{tpu_custom_call.1} parent=5 // pred_check
      %p185 = pneg %p184
    $region22: #{tpu_custom_call.1} parent=5 // pred_check_branch
      %187 = sbr.rel (%p185) target = $region24
    $region23: #{tpu_custom_call.1} parent=5 // pred_region
      // Predicated region
      $region25: #{tpu_custom_call.1} parent=23 // pred_check
        %p188 = pneg %p49
      $region26: #{tpu_custom_call.1} parent=23 // pred_check_branch
        %190 = sbr.rel (%p188) target = $region28
      $region27: #{tpu_custom_call.1} parent=23 // pred_region
        %p191 = scmp.lt.s32.totalorder %s19, 0
        %s192 = scalar_select %p191, %s19, 0
        %p193 = scmp.lt.s32.totalorder %s18, 1
        %s194 = scalar_select %p193, %s18, 1
        %p195 = scmp.lt.s32.totalorder %s192, 0
        %s196 = scalar_select %p195, %s192, 0
        %s197 = smul.addr %s194, 32
        %s198 = sadd.s32 %s196, %s197
        %s199 = smul.addr %s198, 8
        %s200 = scalar_lea.vmem %s0, %s199
        %p201 = scmp.lt.s32.totalorder %s19, 0
        %s202 = scalar_select %p201, %s19, 0
      $region28: #{tpu_custom_call.1} parent=23 // pred_fallthru
        _
      // Predicated region
      $region29: #{tpu_custom_call.1} parent=23 // pred_check
        %p203 = pneg %p87
      $region30: #{tpu_custom_call.1} parent=23 // pred_check_branch
        %205 = sbr.rel (%p203) target = $region32
      $region31: #{tpu_custom_call.1} parent=23 // pred_region
        %s206 = ssub.s32 %s19, 1
        %p207 = scmp.gt.s32.totalorder %s206, 0
        %s208 = scalar_select %p207, %s206, 0
        %p209 = scmp.lt.s32.totalorder %s208, 0
        %s210 = scalar_select %p209, %s208, 0
        %p211 = scmp.lt.s32.totalorder %s18, 1
        %s212 = scalar_select %p211, %s18, 1
        %p213 = scmp.lt.s32.totalorder %s210, 0
        %s214 = scalar_select %p213, %s210, 0
        %s215 = smul.addr %s212, 32
        %s216 = sadd.s32 %s214, %s215
        %s217 = smul.addr %s216, 8
        %s218 = scalar_lea.vmem %s1, %s217
        %s219 = ssub.s32 %s19, 1
        %p220 = scmp.gt.s32.totalorder %s219, 0
        %s221 = scalar_select %p220, %s219, 0
        %p222 = scmp.lt.s32.totalorder %s221, 0
        %s223 = scalar_select %p222, %s221, 0
      $region32: #{tpu_custom_call.1} parent=23 // pred_fallthru
        _
    $region24: #{tpu_custom_call.1} parent=5 // pred_fallthru
      _
    %p224 = scmp.le.s32.totalorder 1, %s11
    %p225 = scmp.lt.s32.totalorder %s11, 3
    %p226 = pnand %p224, %p225
    %p227 = pneg %p226
    // Predicated region
    $region33: #{tpu_custom_call.1} parent=5 // pred_check
      _
    $region34: #{tpu_custom_call.1} parent=5 // pred_check_branch
      %229 = sbr.rel (%p226) target = $region36
    $region35: #{tpu_custom_call.1} parent=5 // pred_region
      %s230 = ssub.s32 %s11, 1
      %p231 = scmp.lt.s32.totalorder %s21, 0
      %s232 = scalar_select %p231, %s21, 0
      %p233 = scmp.lt.s32.totalorder %s20, 1
      %s234 = scalar_select %p233, %s20, 1
      %p235 = scmp.lt.s32.totalorder %s232, 0
      %s236 = scalar_select %p235, %s232, 0
      %s237 = smul.addr %s234, 32
      %s238 = sadd.s32 %s236, %s237
      %s239 = smul.addr %s238, 8
      %s240 = scalar_lea.vmem %s0, %s239
      %p241 = pneg %p55
      %p242 = pneg %p52
      %s243 = ssub.s32 %s21, 1
      %p244 = scmp.gt.s32.totalorder %s243, 0
      %s245 = scalar_select %p244, %s243, 0
      %p246 = scmp.lt.s32.totalorder %s245, 0
      %s247 = scalar_select %p246, %s245, 0
      %p248 = scmp.lt.s32.totalorder %s20, 1
      %s249 = scalar_select %p248, %s20, 1
      %p250 = scmp.lt.s32.totalorder %s247, 0
      %s251 = scalar_select %p250, %s247, 0
      %s252 = smul.addr %s249, 32
      %s253 = sadd.s32 %s251, %s252
      %s254 = smul.addr %s253, 8
      %s255 = scalar_lea.vmem %s1, %s254
      %p256 = pneg %p93
      %p257 = pneg %p90
      %p258 = pneg %p114
      %p259 = pneg %p111
      %p260 = pneg %p135
      %p261 = pneg %p132
      %p262 = pneg %p163
      %p263 = pneg %p160
      %p264 = scmp.lt.s32.totalorder %s20, 1
      %s265 = scalar_select %p264, %s20, 1
      %p266 = scmp.lt.s32.totalorder %s21, 0
      %s267 = scalar_select %p266, %s21, 0
      %s268 = smul.addr %s265, 2
      %s269 = sadd.s32 %s267, %s268
      %s270 = smul.addr %s269, 8
      %s271 = scalar_lea.vmem %s4, %s270
      %p272 = scmp.lt.s32.totalorder %s21, 0
      %s273 = scalar_select %p272, %s21, 0
      %p274 = scmp.lt.s32.totalorder %s20, 1
      %s275 = scalar_select %p274, %s20, 1
      %p276 = scmp.lt.s32.totalorder %s273, 0
      %s277 = scalar_select %p276, %s273, 0
      %s278 = smul.addr %s275, 32
      %s279 = sadd.s32 %s277, %s278
      %s280 = smul.addr %s279, 8
      %s281 = scalar_lea.vmem %s0, %s280
      %p282 = scmp.lt.s32.totalorder %s21, 0
      %s283 = scalar_select %p282, %s21, 0
      %s284 = ssub.s32 %s21, 1
      %p285 = scmp.gt.s32.totalorder %s284, 0
      %s286 = scalar_select %p285, %s284, 0
      %p287 = scmp.lt.s32.totalorder %s286, 0
      %s288 = scalar_select %p287, %s286, 0
      %p289 = scmp.lt.s32.totalorder %s20, 1
      %s290 = scalar_select %p289, %s20, 1
      %p291 = scmp.lt.s32.totalorder %s288, 0
      %s292 = scalar_select %p291, %s288, 0
      %s293 = smul.addr %s290, 32
      %s294 = sadd.s32 %s292, %s293
      %s295 = smul.addr %s294, 8
      %s296 = scalar_lea.vmem %s1, %s295
      %s297 = ssub.s32 %s21, 1
      %p298 = scmp.gt.s32.totalorder %s297, 0
      %s299 = scalar_select %p298, %s297, 0
      %p300 = scmp.lt.s32.totalorder %s299, 0
      %s301 = scalar_select %p300, %s299, 0
      %p302 = scmp.lt.s32.totalorder %s20, 1
      %s303 = scalar_select %p302, %s20, 1
      %p304 = scmp.lt.s32.totalorder %s21, 0
      %s305 = scalar_select %p304, %s21, 0
      %s306 = smul.addr %s303, 2
      %s307 = sadd.s32 %s305, %s306
      %s308 = smul.addr %s307, 8
      %s309 = scalar_lea.vmem %s4, %s308
      %v311 = vld [vmem:[%s2] sm:$0xff]
      %v312 = vld [vmem:[%s2 + $0x8] sm:$0xff]
      %v313 = vld [vmem:[%s2 + $0x10] sm:$0x33]
      %s314 = sld [smem:[#allocation2]]
      %s315 = smul.u32 %s21, 128
      %v316 = vlaneseq
      %v317 = vand.u32 %v316, 127
      %s318 = ssub.s32 %s315, 128
      %v319 = vstv %s318
      %v320 = vadd.s32 %v319, %v317
      %v321 = vld [vmem:[%s296] sm:$0xff]
      %v322 = vld [vmem:[%s296 + $0x8] sm:$0xff]
      %v323 = vld [vmem:[%s296 + $0x10] sm:$0xff]
      %v324 = vld [vmem:[%s296 + $0x18] sm:$0xff]
      %v325 = vld [vmem:[%s296 + $0x20] sm:$0xff]
      %v326 = vld [vmem:[%s296 + $0x28] sm:$0xff]
      %v327 = vld [vmem:[%s296 + $0x30] sm:$0xff]
      %v328 = vld [vmem:[%s296 + $0x38] sm:$0xff]
      %v329 = vld [vmem:[%s296 + $0x40] sm:$0xff]
      %v330 = vld [vmem:[%s296 + $0x48] sm:$0xff]
      %v331 = vld [vmem:[%s296 + $0x50] sm:$0xff]
      %v332 = vld [vmem:[%s296 + $0x58] sm:$0xff]
      %v333 = vld [vmem:[%s296 + $0x60] sm:$0xff]
      %v334 = vld [vmem:[%s296 + $0x68] sm:$0xff]
      %v335 = vld [vmem:[%s296 + $0x70] sm:$0xff]
      %v336 = vld [vmem:[%s296 + $0x78] sm:$0xff]
      %v337 = vld [vmem:[%s296 + $0x80] sm:$0xff]
      %v338 = vld [vmem:[%s296 + $0x88] sm:$0xff]
      %v339 = vld [vmem:[%s296 + $0x90] sm:$0xff]
      %v340 = vld [vmem:[%s296 + $0x98] sm:$0xff]
      %v341 = vld [vmem:[%s296 + $0xa0] sm:$0xff]
      %v342 = vld [vmem:[%s296 + $0xa8] sm:$0xff]
      %v343 = vld [vmem:[%s296 + $0xb0] sm:$0xff]
      %v344 = vld [vmem:[%s296 + $0xb8] sm:$0xff]
      %v345 = vld [vmem:[%s296 + $0xc0] sm:$0xff]
      %v346 = vld [vmem:[%s296 + $0xc8] sm:$0xff]
      %v347 = vld [vmem:[%s296 + $0xd0] sm:$0xff]
      %v348 = vld [vmem:[%s296 + $0xd8] sm:$0xff]
      %v349 = vld [vmem:[%s296 + $0xe0] sm:$0xff]
      %v350 = vld [vmem:[%s296 + $0xe8] sm:$0xff]
      %v351 = vld [vmem:[%s296 + $0xf0] sm:$0xff]
      %v352 = vld [vmem:[%s296 + $0xf8] sm:$0xff]
      %vm353 = vcmp.ge.s32.totalorder %v320, 0
      %vm354 = vcmp.lt.s32.totalorder %v320, 8
      %vm355 = vmand %vm353, %vm354
      %v356 = vsel %vm355, 1, 0
      %vm357 = vcmp.eq.s32.totalorder %v356, 1
      %v358 = vsel %vm357, %v321, 0.0
      %v359 = vsel %vm357, %v322, 0.0
      %v360 = vsel %vm357, %v323, 0.0
      %v361 = vsel %vm357, %v324, 0.0
      %v362 = vsel %vm357, %v325, 0.0
      %v363 = vsel %vm357, %v326, 0.0
      %v364 = vsel %vm357, %v327, 0.0
      %v365 = vsel %vm357, %v328, 0.0
      %v366 = vsel %vm357, %v329, 0.0
      %v367 = vsel %vm357, %v330, 0.0
      %v368 = vsel %vm357, %v331, 0.0
      %v369 = vsel %vm357, %v332, 0.0
      %v370 = vsel %vm357, %v333, 0.0
      %v371 = vsel %vm357, %v334, 0.0
      %v372 = vsel %vm357, %v335, 0.0
      %v373 = vsel %vm357, %v336, 0.0
      %v374 = vsel %vm357, %v337, 0.0
      %v375 = vsel %vm357, %v338, 0.0
      %v376 = vsel %vm357, %v339, 0.0
      %v377 = vsel %vm357, %v340, 0.0
      %v378 = vsel %vm357, %v341, 0.0
      %v379 = vsel %vm357, %v342, 0.0
      %v380 = vsel %vm357, %v343, 0.0
      %v381 = vsel %vm357, %v344, 0.0
      %v382 = vsel %vm357, %v345, 0.0
      %v383 = vsel %vm357, %v346, 0.0
      %v384 = vsel %vm357, %v347, 0.0
      %v385 = vsel %vm357, %v348, 0.0
      %v386 = vsel %vm357, %v349, 0.0
      %v387 = vsel %vm357, %v350, 0.0
      %v388 = vsel %vm357, %v351, 0.0
      %v389 = vsel %vm357, %v352, 0.0
      %v390 = vpack.c.bf16 %v359, %v358
      %v391 = vpack.c.bf16 %v361, %v360
      %v392 = vpack.c.bf16 %v363, %v362
      %v393 = vpack.c.bf16 %v365, %v364
      %v394 = vpack.c.bf16 %v367, %v366
      %v395 = vpack.c.bf16 %v369, %v368
      %v396 = vpack.c.bf16 %v371, %v370
      %v397 = vpack.c.bf16 %v373, %v372
      %v398 = vpack.c.bf16 %v375, %v374
      %v399 = vpack.c.bf16 %v377, %v376
      %v400 = vpack.c.bf16 %v379, %v378
      %v401 = vpack.c.bf16 %v381, %v380
      %v402 = vpack.c.bf16 %v383, %v382
      %v403 = vpack.c.bf16 %v385, %v384
      %v404 = vpack.c.bf16 %v387, %v386
      %v405 = vpack.c.bf16 %v389, %v388
      %v409 = vunpack.c.l.b16 %v311
      %v410 = vunpack.c.h.b16 %v311
      %v411 = vunpack.c.l.b16 %v312
      %v412 = vunpack.c.h.b16 %v312
      %v413 = vunpack.c.l.b16 %v313
      %v414 = vunpack.c.h.b16 %v313
      %v415 = vpack.c.b16 %v411, %v409
      %v416 = vpack.c.b16 %v412, %v410
      %v417 = vpack.c.b16 %v413, %v413
      %v418 = vpack.c.b16 %v414, %v414
      %423 = vmatprep.subr.bf16.mxu0 0
      %424 = vmatpush1.bf16.msra.mxu0 %v390
      %425 = vmatprep.subr.bf16.mxu0 0
      %426 = vmatpush1.bf16.msra.mxu0 %v391
      %427 = vmatprep.subr.bf16.mxu0 0
      %428 = vmatpush1.bf16.msra.mxu0 %v392
      %429 = vmatprep.subr.bf16.mxu0 0
      %430 = vmatpush1.bf16.msra.mxu0 %v393
      %431 = vmatprep.subr.bf16.mxu0 0
      %432 = vmatpush1.bf16.msra.mxu0 %v394
      %433 = vmatprep.subr.bf16.mxu0 0
      %434 = vmatpush1.bf16.msra.mxu0 %v395
      %435 = vmatprep.subr.bf16.mxu0 0
      %436 = vmatpush1.bf16.msra.mxu0 %v396
      %437 = vmatprep.subr.bf16.mxu0 0
      %438 = vmatpush1.bf16.msra.mxu0 %v397
      %439 = vmatprep.subr.bf16.mxu0 0
      %440 = vmatpush1.bf16.msra.mxu0 %v398
      %441 = vmatprep.subr.bf16.mxu0 0
      %442 = vmatpush1.bf16.msra.mxu0 %v399
      %443 = vmatprep.subr.bf16.mxu0 0
      %444 = vmatpush1.bf16.msra.mxu0 %v400
      %445 = vmatprep.subr.bf16.mxu0 0
      %446 = vmatpush1.bf16.msra.mxu0 %v401
      %447 = vmatprep.subr.bf16.mxu0 0
      %448 = vmatpush1.bf16.msra.mxu0 %v402
      %449 = vmatprep.subr.bf16.mxu0 0
      %450 = vmatpush1.bf16.msra.mxu0 %v403
      %451 = vmatprep.subr.bf16.mxu0 0
      %452 = vmatpush1.bf16.msra.mxu0 %v404
      %453 = vmatprep.subr.bf16.mxu0 0
      %454 = vmatpush1.bf16.msra.mxu0 %v405
      %455 = vmatprep.mubr.bf16.mxu0 %v416
      %456 = vmatmul.mubr.bf16.gmra.mrb[0].mxu0 %v415
      %v457 = vpop.f32.mrb[0].mxu0
      %v458 = vpop.f32.mrb[0].mxu0
      %v459 = vpop.f32.mrb[0].mxu0
      %v460 = vadd.f32 0.0, %v459
      %v461 = vpop.f32.mrb[0].mxu0
      %462 = vmatprep.mubr.bf16.mxu0 %v418
      %463 = vmatmul.mubr.bf16.gmra.mrb[0].mxu0 %v417
      %v464 = vpop.f32.mrb[0].mxu0
      %v465 = vadd.f32 0.0, %v464
      %v466 = vpop.f32.mrb[0].mxu0
      %v467 = vpop.f32.mrb[0].mxu0
      %v468 = vpop.f32.mrb[0].mxu0
      %469 = vdwg.mxu0
      %vm472 = vcmask 1045504
      %v473 = vrot.slane %v460, 2
      %v474 = vrot.slane %v465, 2
      %v475 = vsel %vm472, %v473, %v474
      %478 = vrot.lane.b32.xlu0 %v475, 1
      %v479 = vpop.permute.xlu0 %478
      %480 = vrot.lane.b32.xlu0 %v474, 1
      %v481 = vpop.permute.xlu0 %480
      %vm482 = vcmp.lt.s32.totalorder %v317, 1
      %v483 = vsel %vm482, 1, 0
      %vm484 = vcmp.eq.s32.totalorder %v483, 1
      %v485 = vsel %vm484, %v479, 0.0
      %v486 = vsel %vm484, %v481, 0.0
      %v487 = vadd.f32 %v485, 0.0
      %v488 = vadd.f32 %v486, 0.0
      %v489 = vstv %s315
      %v490 = vadd.s32 %v489, %v317
      %v491 = vld [vmem:[%s281] sm:$0xff]
      %v492 = vld [vmem:[%s281 + $0x8] sm:$0xff]
      %v493 = vld [vmem:[%s281 + $0x10] sm:$0xff]
      %v494 = vld [vmem:[%s281 + $0x18] sm:$0xff]
      %v495 = vld [vmem:[%s281 + $0x20] sm:$0xff]
      %v496 = vld [vmem:[%s281 + $0x28] sm:$0xff]
      %v497 = vld [vmem:[%s281 + $0x30] sm:$0xff]
      %v498 = vld [vmem:[%s281 + $0x38] sm:$0xff]
      %v499 = vld [vmem:[%s281 + $0x40] sm:$0xff]
      %v500 = vld [vmem:[%s281 + $0x48] sm:$0xff]
      %v501 = vld [vmem:[%s281 + $0x50] sm:$0xff]
      %v502 = vld [vmem:[%s281 + $0x58] sm:$0xff]
      %v503 = vld [vmem:[%s281 + $0x60] sm:$0xff]
      %v504 = vld [vmem:[%s281 + $0x68] sm:$0xff]
      %v505 = vld [vmem:[%s281 + $0x70] sm:$0xff]
      %v506 = vld [vmem:[%s281 + $0x78] sm:$0xff]
      %v507 = vld [vmem:[%s281 + $0x80] sm:$0xff]
      %v508 = vld [vmem:[%s281 + $0x88] sm:$0xff]
      %v509 = vld [vmem:[%s281 + $0x90] sm:$0xff]
      %v510 = vld [vmem:[%s281 + $0x98] sm:$0xff]
      %v511 = vld [vmem:[%s281 + $0xa0] sm:$0xff]
      %v512 = vld [vmem:[%s281 + $0xa8] sm:$0xff]
      %v513 = vld [vmem:[%s281 + $0xb0] sm:$0xff]
      %v514 = vld [vmem:[%s281 + $0xb8] sm:$0xff]
      %v515 = vld [vmem:[%s281 + $0xc0] sm:$0xff]
      %v516 = vld [vmem:[%s281 + $0xc8] sm:$0xff]
      %v517 = vld [vmem:[%s281 + $0xd0] sm:$0xff]
      %v518 = vld [vmem:[%s281 + $0xd8] sm:$0xff]
      %v519 = vld [vmem:[%s281 + $0xe0] sm:$0xff]
      %v520 = vld [vmem:[%s281 + $0xe8] sm:$0xff]
      %v521 = vld [vmem:[%s281 + $0xf0] sm:$0xff]
      %v522 = vld [vmem:[%s281 + $0xf8] sm:$0xff]
      %vm523 = vcmp.lt.s32.totalorder %v490, 8
      %v524 = vsel %vm523, 1, 0
      %vm525 = vcmp.eq.s32.totalorder %v524, 1
      %v526 = vsel %vm525, %v491, 0.0
      %v527 = vsel %vm525, %v492, 0.0
      %v528 = vsel %vm525, %v493, 0.0
      %v529 = vsel %vm525, %v494, 0.0
      %v530 = vsel %vm525, %v495, 0.0
      %v531 = vsel %vm525, %v496, 0.0
      %v532 = vsel %vm525, %v497, 0.0
      %v533 = vsel %vm525, %v498, 0.0
      %v534 = vsel %vm525, %v499, 0.0
      %v535 = vsel %vm525, %v500, 0.0
      %v536 = vsel %vm525, %v501, 0.0
      %v537 = vsel %vm525, %v502, 0.0
      %v538 = vsel %vm525, %v503, 0.0
      %v539 = vsel %vm525, %v504, 0.0
      %v540 = vsel %vm525, %v505, 0.0
      %v541 = vsel %vm525, %v506, 0.0
      %v542 = vsel %vm525, %v507, 0.0
      %v543 = vsel %vm525, %v508, 0.0
      %v544 = vsel %vm525, %v509, 0.0
      %v545 = vsel %vm525, %v510, 0.0
      %v546 = vsel %vm525, %v511, 0.0
      %v547 = vsel %vm525, %v512, 0.0
      %v548 = vsel %vm525, %v513, 0.0
      %v549 = vsel %vm525, %v514, 0.0
      %v550 = vsel %vm525, %v515, 0.0
      %v551 = vsel %vm525, %v516, 0.0
      %v552 = vsel %vm525, %v517, 0.0
      %v553 = vsel %vm525, %v518, 0.0
      %v554 = vsel %vm525, %v519, 0.0
      %v555 = vsel %vm525, %v520, 0.0
      %v556 = vsel %vm525, %v521, 0.0
      %v557 = vsel %vm525, %v522, 0.0
      %v558 = vpack.c.bf16 %v527, %v526
      %v559 = vpack.c.bf16 %v529, %v528
      %v560 = vpack.c.bf16 %v531, %v530
      %v561 = vpack.c.bf16 %v533, %v532
      %v562 = vpack.c.bf16 %v535, %v534
      %v563 = vpack.c.bf16 %v537, %v536
      %v564 = vpack.c.bf16 %v539, %v538
      %v565 = vpack.c.bf16 %v541, %v540
      %v566 = vpack.c.bf16 %v543, %v542
      %v567 = vpack.c.bf16 %v545, %v544
      %v568 = vpack.c.bf16 %v547, %v546
      %v569 = vpack.c.bf16 %v549, %v548
      %v570 = vpack.c.bf16 %v551, %v550
      %v571 = vpack.c.bf16 %v553, %v552
      %v572 = vpack.c.bf16 %v555, %v554
      %v573 = vpack.c.bf16 %v557, %v556
      %574 = vmatprep.subr.bf16.mxu0 0
      %575 = vmatpush1.bf16.msra.mxu0 %v558
      %576 = vmatprep.subr.bf16.mxu0 0
      %577 = vmatpush1.bf16.msra.mxu0 %v559
      %578 = vmatprep.subr.bf16.mxu0 0
      %579 = vmatpush1.bf16.msra.mxu0 %v560
      %580 = vmatprep.subr.bf16.mxu0 0
      %581 = vmatpush1.bf16.msra.mxu0 %v561
      %582 = vmatprep.subr.bf16.mxu0 0
      %583 = vmatpush1.bf16.msra.mxu0 %v562
      %584 = vmatprep.subr.bf16.mxu0 0
      %585 = vmatpush1.bf16.msra.mxu0 %v563
      %586 = vmatprep.subr.bf16.mxu0 0
      %587 = vmatpush1.bf16.msra.mxu0 %v564
      %588 = vmatprep.subr.bf16.mxu0 0
      %589 = vmatpush1.bf16.msra.mxu0 %v565
      %590 = vmatprep.subr.bf16.mxu0 0
      %591 = vmatpush1.bf16.msra.mxu0 %v566
      %592 = vmatprep.subr.bf16.mxu0 0
      %593 = vmatpush1.bf16.msra.mxu0 %v567
      %594 = vmatprep.subr.bf16.mxu0 0
      %595 = vmatpush1.bf16.msra.mxu0 %v568
      %596 = vmatprep.subr.bf16.mxu0 0
      %597 = vmatpush1.bf16.msra.mxu0 %v569
      %598 = vmatprep.subr.bf16.mxu0 0
      %599 = vmatpush1.bf16.msra.mxu0 %v570
      %600 = vmatprep.subr.bf16.mxu0 0
      %601 = vmatpush1.bf16.msra.mxu0 %v571
      %602 = vmatprep.subr.bf16.mxu0 0
      %603 = vmatpush1.bf16.msra.mxu0 %v572
      %604 = vmatprep.subr.bf16.mxu0 0
      %605 = vmatpush1.bf16.msra.mxu0 %v573
      %606 = vmatprep.mubr.bf16.mxu0 %v416
      %607 = vmatmul.mubr.bf16.gmra.mrb[0].mxu0 %v415
      %v608 = vpop.f32.mrb[0].mxu0
      %v609 = vadd.f32 0.0, %v608
      %v610 = vpop.f32.mrb[0].mxu0
      %v611 = vpop.f32.mrb[0].mxu0
      %v612 = vadd.f32 0.0, %v611
      %v613 = vpop.f32.mrb[0].mxu0
      %614 = vmatprep.mubr.bf16.mxu0 %v418
      %615 = vmatmul.mubr.bf16.gmra.mrb[0].mxu0 %v417
      %v616 = vpop.f32.mrb[0].mxu0
      %v617 = vadd.f32 0.0, %v616
      %v618 = vpop.f32.mrb[0].mxu0
      %v619 = vpop.f32.mrb[0].mxu0
      %v620 = vpop.f32.mrb[0].mxu0
      %621 = vdwg.mxu0
      %v622 = vadd.f32 %v487, %v609
      %v623 = vadd.f32 %v488, %v612
      %v626 = vrot.slane %v612, 2
      %v627 = vrot.slane %v617, 2
      %v628 = vsel %vm472, %v626, %v627
      %631 = vrot.lane.b32.xlu0 %v628, 1
      %v632 = vpop.permute.xlu0 %631
      %633 = vrot.lane.b32.xlu0 %v627, 1
      %v634 = vpop.permute.xlu0 %633
      %vm635 = vcmp.ge.s32.totalorder %v317, 1
      %v636 = vsel %vm635, 1, 0
      %vm637 = vcmp.eq.s32.totalorder %v636, 1
      %v638 = vsel %vm637, %v632, 0.0
      %v639 = vsel %vm637, %v634, 0.0
      %v640 = vadd.f32 %v622, %v638
      %v641 = vadd.f32 %v623, %v639
      %v642 = vstv %s314
      %v643 = vadd.f32 %v640, %v642
      %v644 = vadd.f32 %v641, %v642
      %645 = vst [vmem:[%s309] sm:$0xff] %v643
      %646 = vst [vmem:[%s309 + $0x8] sm:$0x3] %v644
      %p647 = scmp.lt.s32.totalorder %s20, 1
      %s648 = scalar_select %p647, %s20, 1
      %p649 = scmp.lt.s32.totalorder %s21, 0
      %s650 = scalar_select %p649, %s21, 0
      %s651 = smul.addr %s648, 2
      %s652 = sadd.s32 %s650, %s651
      %s653 = smul.addr %s652, 8
      %s654 = scalar_lea.vmem %s4, %s653
      // Predicated region
      $region37: #{tpu_custom_call.1} parent=35 // pred_check
        %p655 = pneg %p160
      $region38: #{tpu_custom_call.1} parent=35 // pred_check_branch
        %657 = sbr.rel (%p655) target = $region40
      $region39: #{tpu_custom_call.1} parent=35 // pred_region
        _
      $region40: #{tpu_custom_call.1} parent=35 // pred_fallthru
        _
    $region36: #{tpu_custom_call.1} parent=5 // pred_fallthru
      _
    %p658 = scmp.le.s32.totalorder 2, %s11
    // Predicated region
    $region41: #{tpu_custom_call.1} parent=5 // pred_check
      %p659 = pneg %p658
    $region42: #{tpu_custom_call.1} parent=5 // pred_check_branch
      %661 = sbr.rel (%p659) target = $region44
    $region43: #{tpu_custom_call.1} parent=5 // pred_region
      %s662 = ssub.s32 %s11, 2
      // Predicated region
      $region45: #{tpu_custom_call.1} parent=43 // pred_check
        %p663 = pneg %p166
      $region46: #{tpu_custom_call.1} parent=43 // pred_check_branch
        %665 = sbr.rel (%p663) target = $region48
      $region47: #{tpu_custom_call.1} parent=43 // pred_region
        %p666 = scmp.lt.s32.totalorder %s22, 1
        %s667 = scalar_select %p666, %s22, 1
        %p668 = scmp.lt.s32.totalorder %s23, 0
        %s669 = scalar_select %p668, %s23, 0
        %s670 = smul.addr %s667, 2
        %s671 = sadd.s32 %s669, %s670
        %s672 = smul.addr %s671, 8
        %s673 = scalar_lea.vmem %s4, %s672
      $region48: #{tpu_custom_call.1} parent=43 // pred_fallthru
        _
    $region44: #{tpu_custom_call.1} parent=5 // pred_fallthru
      _
  $region6: #{tpu_custom_call.1} parent=0 // loop_footer
    %s15 = sadd.s32 1, %s11
  $region7: #{tpu_custom_call.1} parent=0 // loop_footer_branch
    %10 = sbr.rel target = $region3
  $region8: #{tpu_custom_call.1} parent=0 // loop_exit
    _

</llo_original>
